<compile_context>
chip_gen: v5e
topology: v5e:2x2
jax: 0.10.0
libtpu: 0.0.40
codegen_flags: <defaults>
</compile_context>

<pallas_src>
import jax
import jax.numpy as jnp
from jax.experimental import pallas as pl
from jax.experimental.pallas import tpu as pltpu

_TM_MAX = 8192          # max batch-tile rows (VMEM-safe on v5e/v6e/v7x)
_PALLAS_MIN_BATCH = 1024  # below this, a fused XLA matmul beats a custom call


def _linear_kernel(x_ref, wt_ref, b_ref, o_ref):
    # Single MXU pass (f32 accumulate) + broadcast bias add, written directly
    # to the narrow (tm, n_way) output tile. No scratch accumulator needed.
    o_ref[...] = (
        jnp.dot(x_ref[...], wt_ref[...], preferred_element_type=jnp.float32)
        + b_ref[...]
    ).astype(o_ref.dtype)


def prepare_classifier_params(w, b):
    """One-time parameter prep (hoisted out of the forward path).

    w: [n_way, dim] -> w_t:   [dim, n_way]
    b: [n_way]      -> b_row: [1,   n_way]
    """
    return w.T, b.reshape(1, -1)


@jax.jit
def _classifier_forward_xla(x, w_t, b_row):
    # Tiny-batch path: let XLA fuse the matmul + bias into the surrounding graph.
    return x @ w_t + b_row


@jax.jit
def _classifier_forward_pallas(x, w_t, b_row):
    """x: [B, dim], w_t: [dim, n_way], b_row: [1, n_way] -> [B, n_way]."""
    B, dim = x.shape
    n_way = w_t.shape[1]
    itemsize = x.dtype.itemsize

    # Batch-tile selection:
    #   * B <= 1024: single whole-batch block (per-step overhead dominates
    #     anyway; splitting would only add prologue/epilogue cost).
    #   * B  > 1024: >= 2 balanced tiles (so v7x's 2 TensorCores both work),
    #     capped near _TM_MAX rows to amortize per-step overhead while keeping
    #     double-buffered VMEM tiny (~2.3 MiB at tm=8192).
    if B <= _PALLAS_MIN_BATCH:
        tm = B
    else:
        n_steps = max(2, pl.cdiv(B, _TM_MAX))
        tm = min(B, ((pl.cdiv(B, n_steps) + 7) // 8) * 8)
    grid = (pl.cdiv(B, tm),)  # ragged last tile handled by partial edge DMA

    cost = pl.CostEstimate(
        flops=2 * B * dim * n_way,
        transcendentals=0,
        bytes_accessed=(B * dim + dim * n_way + n_way + B * n_way) * itemsize,
    )

    return pl.pallas_call(
        _linear_kernel,
        out_shape=jax.ShapeDtypeStruct((B, n_way), x.dtype),
        grid=grid,
        in_specs=[
            pl.BlockSpec((tm, dim), lambda i: (i, 0)),      # batch tile of x
            pl.BlockSpec((dim, n_way), lambda i: (0, 0)),   # full weight, reused
            pl.BlockSpec((1, n_way), lambda i: (0, 0)),     # full bias, reused
        ],
        out_specs=pl.BlockSpec((tm, n_way), lambda i: (i, 0)),
        compiler_params=pltpu.CompilerParams(
            dimension_semantics=("parallel",),  # batch axis -> 2-TC sharding on v7x
        ),
        cost_estimate=cost,
    )(x, w_t, b_row)


def classifier_forward(x, w_t, b_row, *, use_pallas=None):
    """Classifier.forward: returns x @ W.T + b with shape [B, n_way]."""
    if use_pallas is None:
        use_pallas = x.shape[0] >= _PALLAS_MIN_BATCH
    if use_pallas:
        return _classifier_forward_pallas(x, w_t, b_row)
    return _classifier_forward_xla(x, w_t, b_row)


if __name__ == "__main__":
    # Small shapes consistent with the module: dim=32, n_way=5, batch=8.
    dim, n_way, batch = 32, 5, 8

    key = jax.random.PRNGKey(0)
    kx, kw, kb, kx2 = jax.random.split(key, 4)

    # Deterministic init matching nn.Linear's default U(-1/sqrt(dim), 1/sqrt(dim)).
    bound = 1.0 / (dim ** 0.5)
    w = jax.random.uniform(kw, (n_way, dim), jnp.float32, -bound, bound)
    b = jax.random.uniform(kb, (n_way,), jnp.float32, -bound, bound)
    x = jax.random.normal(kx, (batch, dim), jnp.float32)

    # One-time (init-time) parameter prep — not part of the per-call path.
    w_t, b_row = prepare_classifier_params(w, b)

    # 1) Native tiny shape, forcing the Pallas path so the kernel is exercised.
    out = classifier_forward(x, w_t, b_row, use_pallas=True)
    out = jax.block_until_ready(out)
    ref = x @ w.T + b
    assert out.shape == (batch, n_way)
    assert jnp.allclose(out, ref, atol=1e-5, rtol=1e-5)

    # 2) Modest larger batch (ragged, 2 balanced grid steps) exercising the
    #    cdiv grid / partial-edge-tile path on the auto-dispatch route.
    B2 = 2500
    x2 = jax.random.normal(kx2, (B2, dim), jnp.float32)
    out2 = classifier_forward(x2, w_t, b_row)
    out2 = jax.block_until_ready(out2)
    ref2 = x2 @ w.T + b
    assert out2.shape == (B2, n_way)
    assert jnp.allclose(out2, ref2, atol=1e-4, rtol=1e-5)

    print("KERNEL_OK")
</pallas_src>

<mosaic_0001>
module attributes {stable_mosaic.version = 11 : i64} {
  func.func @_linear_kernel(%arg0: i32, %arg1: memref<8x32xf32, #tpu.memory_space<vmem>>, %arg2: memref<32x5xf32, #tpu.memory_space<vmem>>, %arg3: memref<1x5xf32, #tpu.memory_space<vmem>>, %arg4: memref<8x5xf32, #tpu.memory_space<vmem>>) attributes {dimension_semantics = [#tpu.dimension_semantics<parallel>], iteration_bounds = array<i64: 1>, scalar_prefetch = 0 : i64, scratch_operands = 0 : i64, tpu.core_type = #tpu.core_type<tc>, window_params = [{transform_indices = @transform_0, window_bounds = array<i64: 8, 32>}, {pipeline_mode = #tpu.pipeline_mode<synchronous>, transform_indices = @transform_1, window_bounds = array<i64: 32, 5>}, {pipeline_mode = #tpu.pipeline_mode<synchronous>, transform_indices = @transform_2, window_bounds = array<i64: 1, 5>}, {transform_indices = @transform_3, window_bounds = array<i64: 8, 5>}]} {
    %c0 = arith.constant 0 : index
    %c0_0 = arith.constant 0 : index
    %0 = vector.load %arg1[%c0, %c0_0] : memref<8x32xf32, #tpu.memory_space<vmem>>, vector<8x32xf32>
    %c0_1 = arith.constant 0 : index
    %c0_2 = arith.constant 0 : index
    %1 = vector.load %arg2[%c0_1, %c0_2] : memref<32x5xf32, #tpu.memory_space<vmem>>, vector<32x5xf32>
    %cst = arith.constant dense<0.000000e+00> : vector<8x5xf32>
    %2 = tpu.matmul %0, %1, %cst {dimension_numbers = #tpu.dot_dimension_numbers<[1], [0], [0], [1], [0, 0, 1, 1], [], []>} : vector<8x32xf32>, vector<32x5xf32>, vector<8x5xf32> -> vector<8x5xf32>
    %c0_3 = arith.constant 0 : index
    %c0_4 = arith.constant 0 : index
    %3 = vector.load %arg3[%c0_3, %c0_4] : memref<1x5xf32, #tpu.memory_space<vmem>>, vector<1x5xf32>
    %4 = vector.broadcast %3 : vector<1x5xf32> to vector<8x5xf32>
    %5 = arith.addf %2, %4 : vector<8x5xf32>
    %c0_5 = arith.constant 0 : index
    %c0_6 = arith.constant 0 : index
    %6 = vector.load %arg4[%c0_5, %c0_6] : memref<8x5xf32, #tpu.memory_space<vmem>>, vector<8x5xf32>
    tpu.vector_store %arg4[%c0_5, %c0_6], %5 {strides = array<i32>} : memref<8x5xf32, #tpu.memory_space<vmem>>, vector<8x5xf32>,
    return
  }
  func.func @transform_0(%arg0: i32) -> (i32, i32) {
    %c0_i32 = arith.constant 0 : i32
    %c0_i32_0 = arith.constant 0 : i32
    return %arg0, %c0_i32 : i32, i32
  }
  func.func @transform_1(%arg0: i32) -> (i32, i32) {
    %c0_i32 = arith.constant 0 : i32
    %c0_i32_0 = arith.constant 0 : i32
    %c0_i32_1 = arith.constant 0 : i32
    return %c0_i32, %c0_i32_0 : i32, i32
  }
  func.func @transform_2(%arg0: i32) -> (i32, i32) {
    %c0_i32 = arith.constant 0 : i32
    %c0_i32_0 = arith.constant 0 : i32
    %c0_i32_1 = arith.constant 0 : i32
    return %c0_i32, %c0_i32_0 : i32, i32
  }
  func.func @transform_3(%arg0: i32) -> (i32, i32) {
    %c0_i32 = arith.constant 0 : i32
    %c0_i32_0 = arith.constant 0 : i32
    return %arg0, %c0_i32 : i32, i32
  }
}

</mosaic_0001>

<llo_original>
// kernel: _classifier_forward_pallas.1
$region0: #{_classifier_forward_pallas.1}
  #allocation0 [shape = 'u32[]', space=smem, size = 0x4, offset = 0x4, fixed_abs, tag = 'smem constant byte address 0x4 - core index']
  #allocation1 [shape = 'u32[72,128]{1,0:T(1,128)}', space=vmem, size = 0x9000, scoped, tag = 'internal scratch']
  %s0 = inlined_call_operand.vmem [shape: f32[8,32], index: 0, kind: input, shape index: {}]
  %s1 = inlined_call_operand.vmem [shape: f32[32,5], index: 1, kind: input, shape index: {}]
  %s2 = inlined_call_operand.vmem [shape: f32[1,5], index: 2, kind: input, shape index: {}]
  %s3 = inlined_call_operand.hbm [shape: f32[8,5], index: 3, kind: output, shape index: {}]
  %s4 = sld [smem:[#allocation0]]
  $region22: #{_classifier_forward_pallas.1} parent=0
    _
  %s6 = ssub.s32 1, %s4
  %s7 = scalar_select 0, %s6, %s4
  $region1: #{_classifier_forward_pallas.1} parent=0
    #allocation2 [shape = 'u8[4096]{0}', space=vmem, size = 0x1000, scoped, tag = 'output window, operand 0, single buffered']
    #allocation3 [shape = 's32[1]{0}', space=sflag, size = 0x4, scoped, tag = 'scoped memory for _classifier_forward_pallas.1']
    %8 = vsyncpa [#allocation3], 0
    // Predicated region
    $region2: #{_classifier_forward_pallas.1} parent=1 // pred_check
      _
    $region3: #{_classifier_forward_pallas.1} parent=1 // pred_check_branch
      %10 = sbr.rel (0) target = $region5
    $region4: #{_classifier_forward_pallas.1} parent=1 // pred_region
      _
    $region5: #{_classifier_forward_pallas.1} parent=1 // pred_fallthru
      _
    // Predicated region
    $region6: #{_classifier_forward_pallas.1} parent=1 // pred_check
      _
    $region7: #{_classifier_forward_pallas.1} parent=1 // pred_check_branch
      %12 = sbr.rel (0) target = $region9
    $region8: #{_classifier_forward_pallas.1} parent=1 // pred_region
      _
    $region9: #{_classifier_forward_pallas.1} parent=1 // pred_fallthru
      _
    // Predicated region
    $region10: #{_classifier_forward_pallas.1} parent=1 // pred_check
      _
    $region11: #{_classifier_forward_pallas.1} parent=1 // pred_check_branch
      %14 = sbr.rel (0) target = $region13
    $region12: #{_classifier_forward_pallas.1} parent=1 // pred_region
      _
    $region13: #{_classifier_forward_pallas.1} parent=1 // pred_fallthru
      _
    %v15 = vld [vmem:[%s0] sm:$0xff]
    %v16 = vld [vmem:[%s1] sm:$0xff]
    %v17 = vld [vmem:[%s1 + $0x8] sm:$0xff]
    %v18 = vld [vmem:[%s1 + $0x10] sm:$0xff]
    %v19 = vld [vmem:[%s1 + $0x18] sm:$0xff]
    %v20 = vld [vmem:[%s2] sm:$0x1]
    %v22 = vperm.slane %v20, 0
    %vm24 = vcmask 261120
    %v26 = vsel %vm24, %v15, 0
    %28 = vmatpush.msra.mxu0 0.0
    %29 = vmatpush.msra.mxu0 0.0
    %30 = vmatpush.msra.mxu0 0.0
    %31 = vmatpush.msra.mxu0 0.0
    %32 = vmatpush.msra.mxu0 0.0
    %33 = vmatpush.msra.mxu0 0.0
    %34 = vmatpush.msra.mxu0 0.0
    %35 = vmatpush.msra.mxu0 0.0
    %36 = vmatpush.msra.mxu0 0.0
    %37 = vmatpush.msra.mxu0 0.0
    %38 = vmatpush.msra.mxu0 0.0
    %39 = vmatpush.msra.mxu0 0.0
    %40 = vmatpush.msra.mxu0 %v19
    %41 = vmatpush.msra.mxu0 %v18
    %42 = vmatpush.msra.mxu0 %v17
    %43 = vmatpush.msra.mxu0 %v16
    %44 = vmatmul.f32.gmra.mxu0 %v26
    %v45 = vpop.f32.mrf.mxu0
    %v46 = vadd.f32 %v22, %v45
    %47 = vdwg.mxu0
    %vm48 = vcmask 39936
    %49 = vst.msk [vmem:[#allocation2] sm:$0xff] %vm48, %v46
    // Predicated region
    $region14: #{_classifier_forward_pallas.1} parent=1 // pred_check
      _
    $region15: #{_classifier_forward_pallas.1} parent=1 // pred_check_branch
      %51 = sbr.rel (0) target = $region17
    $region16: #{_classifier_forward_pallas.1} parent=1 // pred_region
      %53 = vsyncadd [#allocation3], 0
      %s55 = sshll.u32 [#allocation2], 4
      %s56 = int_to_ptr.vmem [resolvable:$true] %s55
      %s57 = sshll.u32 %s3, 4
      %s58 = int_to_ptr.hbm [resolvable:$true] %s57
      %60 = dma.vmem_to_hbm [thread:$0]  %s56, 128, %s58, [#allocation3]
    $region17: #{_classifier_forward_pallas.1} parent=1 // pred_fallthru
      _
    // Predicated region
    $region18: #{_classifier_forward_pallas.1} parent=1 // pred_check
      _
    $region19: #{_classifier_forward_pallas.1} parent=1 // pred_check_branch
      %62 = sbr.rel (0) target = $region21
    $region20: #{_classifier_forward_pallas.1} parent=1 // pred_region
      %64 = dma.done [#allocation3], 128
    $region21: #{_classifier_forward_pallas.1} parent=1 // pred_fallthru
      _
    %65 = vsyncpa [#allocation3], 1

</llo_original>
